<compile_context>
chip_gen: v5e
topology: v5e:2x2
jax: 0.10.0
libtpu: 0.0.40
codegen_flags: <defaults>
</compile_context>

<pallas_src>
import jax
import jax.numpy as jnp
from jax.experimental import pallas as pl
from jax.experimental.pallas import tpu as pltpu


def _round_up(x, m):
    return ((x + m - 1) // m) * m


def value_net_kernel(s_ref, w1_ref, b1_ref, w2_ref, b2_ref, w3_ref, b3_ref, o_ref):
    TB = s_ref.shape[0]
    D = s_ref.shape[1]

    # ---- input layer:  (TB, D) @ (D, H) + b1 -----------------------------
    if D <= 16:
        # K is tiny (e.g. obs_dim = 4): D broadcast FMAs on the VPU beat a
        # degenerate MXU pass (sublane dim would be padded to 8 anyway).
        x = s_ref[:, 0:1] * w1_ref[0:1, :]
        for k in range(1, D):
            x = x + s_ref[:, k:k + 1] * w1_ref[k:k + 1, :]
        x = x + b1_ref[...]
    else:
        x = jnp.dot(s_ref[...], w1_ref[...],
                    preferred_element_type=jnp.float32) + b1_ref[...]

    # ---- hidden path in bf16 ---------------------------------------------
    # bf16 tanh halves the EUP pushes (the likely saturating unit) on
    # v6e/v7x; on v5e the compiler simply widens the elementwise ops.
    x = jnp.tanh(x.astype(jnp.bfloat16))                       # (TB, H) bf16

    # fc layer: the only real MXU matmul (H x H), bf16 operands / f32 acc.
    h = jnp.dot(x, w2_ref[...], preferred_element_type=jnp.float32)
    h = jnp.tanh((h + b2_ref[...]).astype(jnp.bfloat16))       # (TB, H) bf16

    # ---- output layer: N = 1 -> VPU multiply + lane reduction (f32) -------
    # bf16 * f32 promotes to f32, so the reduction and bias stay full prec.
    v = jnp.sum(h * w3_ref[...], axis=-1) + b3_ref[0]          # (TB,) f32

    # lane-dense store: values land on the lane axis of a (1, TB) block.
    # (The sublane->lane relayout here rides the XLU, which has slack.)
    o_ref[...] = v.reshape(1, TB)


def _choose_batch_tiling(B, max_tile=2048):
    """Pick (TB, n_tiles): TB <= 2048 (amortize per-step overhead, stay well
    inside v5e's default scoped VMEM), an even tile count >= 2 whenever the
    batch can be split (v7x megacore), padding bounded by <128 rows/tile."""
    b128 = _round_up(B, 128)
    n_tiles = max(1, pl.cdiv(b128, max_tile))
    if b128 >= 256:                   # give v7x's 2 TensorCores work to share
        n_tiles = max(n_tiles, 2)
    if n_tiles > 1 and n_tiles % 2:   # even count balances the 2 TCs
        n_tiles += 1
    TB = _round_up(pl.cdiv(b128, n_tiles), 128)
    return TB, n_tiles


def value_network_forward(s, params):
    """s: (B, D) float32. Returns (B,) float32 — value estimate per state.

    Note: for tiny batches (B ~ 8) the pallas_call launch overhead dominates;
    batch many env states / timesteps into one call for real throughput.
    """
    w1, b1, w2, b2, w3, b3 = params
    B, D = s.shape
    H = w1.shape[1]

    TB, n_tiles = _choose_batch_tiling(B)
    B_pad = TB * n_tiles
    if B_pad != B:
        s = jnp.pad(s, ((0, B_pad - B), (0, 0)))

    # Only the H x H weight feeds the MXU; give it bf16 operands.
    w2_bf16 = w2.astype(jnp.bfloat16)

    const2 = lambda i: (0, 0)   # weights/biases: block index never changes -> VMEM-resident
    # (pl.Buffered(1) on these would shave ~50 KB of double-buffer VMEM; gain
    #  is negligible at H=128 so the default pipelining is kept.)

    out = pl.pallas_call(
        value_net_kernel,
        out_shape=jax.ShapeDtypeStruct((1, B_pad), jnp.float32),
        grid=(n_tiles,),
        in_specs=[
            pl.BlockSpec((TB, D), lambda i: (i, 0)),      # state tile streams over batch
            pl.BlockSpec((D, H), const2),                 # w1  (f32)
            pl.BlockSpec((1, H), const2),                 # b1  (f32)
            pl.BlockSpec((H, H), const2),                 # w2  (bf16, MXU operand)
            pl.BlockSpec((1, H), const2),                 # b2  (f32)
            pl.BlockSpec((1, H), const2),                 # w3 row (f32)
            pl.BlockSpec(memory_space=pltpu.MemorySpace.SMEM),   # b3 scalar
        ],
        out_specs=pl.BlockSpec((1, TB), lambda i: (0, i)),       # lane-dense output
        compiler_params=pltpu.CompilerParams(
            dimension_semantics=("parallel",)),                  # megacore on v7x
        cost_estimate=pl.CostEstimate(
            flops=2 * B_pad * (D * H + H * H + H),
            transcendentals=2 * B_pad * H,
            bytes_accessed=(4 * (B_pad * D + D * H + 3 * H + 1 + B_pad)
                            + 2 * H * H)),
    )(s, w1, b1, w2_bf16, b2, w3, b3)

    # squeeze(dim=-1) equivalent: drop padding, return (B,)
    return out[0, :B]


def init_params(key, obs_dim, hidden=128):
    """Deterministic init matching nn.Linear shapes (kept in f32).

    Weights stored (in, out); w3 stored as a (1, H) row; b3 as a (1,) scalar.
    """
    ks = jax.random.split(key, 6)

    def linear(kw, kb, fan_in, fan_out):
        bound = 1.0 / jnp.sqrt(jnp.float32(fan_in))
        w = jax.random.uniform(kw, (fan_in, fan_out), jnp.float32, -bound, bound)
        b = jax.random.uniform(kb, (1, fan_out), jnp.float32, -bound, bound)
        return w, b

    w1, b1 = linear(ks[0], ks[1], obs_dim, hidden)       # input_layer
    w2, b2 = linear(ks[2], ks[3], hidden, hidden)        # fc_layer
    w3_col, b3_ = linear(ks[4], ks[5], hidden, 1)        # output_layer
    w3 = w3_col.reshape(1, hidden)                       # (1, H) row for VPU mul + lane-sum
    b3 = b3_.reshape(1)                                  # (1,) SMEM scalar
    return (w1, b1, w2, b2, w3, b3)


def reference_forward(s, params):
    """Full-f32 reference of the PyTorch forward."""
    w1, b1, w2, b2, w3, b3 = params
    x = jnp.tanh(s @ w1 + b1)
    x = jnp.tanh(x @ w2 + b2)
    return jnp.sum(x * w3, axis=-1) + b3[0]


if __name__ == "__main__":
    key = jax.random.PRNGKey(0)
    k_s, k_p, k_s2, k_s3 = jax.random.split(key, 4)

    B, D, H = 8, 4, 128                      # batch=8, obs_dim=4, hidden=128
    s = jax.random.normal(k_s, (B, D), jnp.float32)
    params = init_params(k_p, D, H)

    # bf16 hidden path -> compare to f32 reference at a loose tolerance.
    TOL = 5e-2

    out = jax.block_until_ready(value_network_forward(s, params))
    ref = reference_forward(s, params)
    assert out.shape == (B,)
    assert jnp.allclose(out, ref, atol=TOL, rtol=TOL)

    # Multi-tile grid (2 tiles, even -> both v7x TCs) + padding path.
    B2 = 300
    s2 = jax.random.normal(k_s2, (B2, D), jnp.float32)
    out2 = jax.block_until_ready(value_network_forward(s2, params))
    ref2 = reference_forward(s2, params)
    assert out2.shape == (B2,)
    assert jnp.allclose(out2, ref2, atol=TOL, rtol=TOL)

    # Large batch: exercises the big-tile (TB ~ 1280) / 4-tile path.
    B3 = 5000
    s3 = jax.random.normal(k_s3, (B3, D), jnp.float32)
    out3 = jax.block_until_ready(value_network_forward(s3, params))
    ref3 = reference_forward(s3, params)
    assert out3.shape == (B3,)
    assert jnp.allclose(out3, ref3, atol=TOL, rtol=TOL)

    print("KERNEL_OK")
</pallas_src>

<mosaic_0001>
module attributes {stable_mosaic.version = 11 : i64} {
  func.func @value_net_kernel(%arg0: i32, %arg1: memref<128x4xf32, #tpu.memory_space<vmem>>, %arg2: memref<4x128xf32, #tpu.memory_space<vmem>>, %arg3: memref<1x128xf32, #tpu.memory_space<vmem>>, %arg4: memref<128x128xbf16, #tpu.memory_space<vmem>>, %arg5: memref<1x128xf32, #tpu.memory_space<vmem>>, %arg6: memref<1x128xf32, #tpu.memory_space<vmem>>, %arg7: memref<1xf32, #tpu.memory_space<smem>>, %arg8: memref<1x128xf32, #tpu.memory_space<vmem>>) attributes {dimension_semantics = [#tpu.dimension_semantics<parallel>], iteration_bounds = array<i64: 1>, scalar_prefetch = 0 : i64, scratch_operands = 0 : i64, tpu.core_type = #tpu.core_type<tc>, window_params = [{transform_indices = @transform_0, window_bounds = array<i64: 128, 4>}, {pipeline_mode = #tpu.pipeline_mode<synchronous>, transform_indices = @transform_1, window_bounds = array<i64: 4, 128>}, {pipeline_mode = #tpu.pipeline_mode<synchronous>, transform_indices = @transform_2, window_bounds = array<i64: 1, 128>}, {pipeline_mode = #tpu.pipeline_mode<synchronous>, transform_indices = @transform_3, window_bounds = array<i64: 128, 128>}, {pipeline_mode = #tpu.pipeline_mode<synchronous>, transform_indices = @transform_4, window_bounds = array<i64: 1, 128>}, {pipeline_mode = #tpu.pipeline_mode<synchronous>, transform_indices = @transform_5, window_bounds = array<i64: 1, 128>}, {transform_indices = @transform_6, window_bounds = array<i64: 1>}, {transform_indices = @transform_7, window_bounds = array<i64: 1, 128>}]} {
    %c0 = arith.constant 0 : index
    %c0_0 = arith.constant 0 : index
    %0 = vector.load %arg1[%c0, %c0_0] : memref<128x4xf32, #tpu.memory_space<vmem>>, vector<128x1xf32>
    %c0_1 = arith.constant 0 : index
    %c0_2 = arith.constant 0 : index
    %1 = vector.load %arg2[%c0_1, %c0_2] : memref<4x128xf32, #tpu.memory_space<vmem>>, vector<1x128xf32>
    %2 = vector.broadcast %0 : vector<128x1xf32> to vector<128x128xf32>
    %3 = vector.broadcast %1 : vector<1x128xf32> to vector<128x128xf32>
    %4 = arith.mulf %2, %3 : vector<128x128xf32>
    %c0_3 = arith.constant 0 : index
    %c1 = arith.constant 1 : index
    %5 = vector.load %arg1[%c0_3, %c1] : memref<128x4xf32, #tpu.memory_space<vmem>>, vector<128x1xf32>
    %c1_4 = arith.constant 1 : index
    %c0_5 = arith.constant 0 : index
    %6 = vector.load %arg2[%c1_4, %c0_5] : memref<4x128xf32, #tpu.memory_space<vmem>>, vector<1x128xf32>
    %7 = vector.broadcast %5 : vector<128x1xf32> to vector<128x128xf32>
    %8 = vector.broadcast %6 : vector<1x128xf32> to vector<128x128xf32>
    %9 = arith.mulf %7, %8 : vector<128x128xf32>
    %10 = arith.addf %4, %9 : vector<128x128xf32>
    %c0_6 = arith.constant 0 : index
    %c2 = arith.constant 2 : index
    %11 = vector.load %arg1[%c0_6, %c2] : memref<128x4xf32, #tpu.memory_space<vmem>>, vector<128x1xf32>
    %c2_7 = arith.constant 2 : index
    %c0_8 = arith.constant 0 : index
    %12 = vector.load %arg2[%c2_7, %c0_8] : memref<4x128xf32, #tpu.memory_space<vmem>>, vector<1x128xf32>
    %13 = vector.broadcast %11 : vector<128x1xf32> to vector<128x128xf32>
    %14 = vector.broadcast %12 : vector<1x128xf32> to vector<128x128xf32>
    %15 = arith.mulf %13, %14 : vector<128x128xf32>
    %16 = arith.addf %10, %15 : vector<128x128xf32>
    %c0_9 = arith.constant 0 : index
    %c3 = arith.constant 3 : index
    %17 = vector.load %arg1[%c0_9, %c3] : memref<128x4xf32, #tpu.memory_space<vmem>>, vector<128x1xf32>
    %c3_10 = arith.constant 3 : index
    %c0_11 = arith.constant 0 : index
    %18 = vector.load %arg2[%c3_10, %c0_11] : memref<4x128xf32, #tpu.memory_space<vmem>>, vector<1x128xf32>
    %19 = vector.broadcast %17 : vector<128x1xf32> to vector<128x128xf32>
    %20 = vector.broadcast %18 : vector<1x128xf32> to vector<128x128xf32>
    %21 = arith.mulf %19, %20 : vector<128x128xf32>
    %22 = arith.addf %16, %21 : vector<128x128xf32>
    %c0_12 = arith.constant 0 : index
    %c0_13 = arith.constant 0 : index
    %23 = vector.load %arg3[%c0_12, %c0_13] : memref<1x128xf32, #tpu.memory_space<vmem>>, vector<1x128xf32>
    %24 = vector.broadcast %23 : vector<1x128xf32> to vector<128x128xf32>
    %25 = arith.addf %22, %24 : vector<128x128xf32>
    %26 = arith.truncf %25 : vector<128x128xf32> to vector<128x128xbf16>
    %27 = math.tanh %26 : vector<128x128xbf16>
    %c0_14 = arith.constant 0 : index
    %c0_15 = arith.constant 0 : index
    %28 = vector.load %arg4[%c0_14, %c0_15] : memref<128x128xbf16, #tpu.memory_space<vmem>>, vector<128x128xbf16>
    %cst = arith.constant dense<0.000000e+00> : vector<128x128xf32>
    %29 = tpu.matmul %27, %28, %cst {dimension_numbers = #tpu.dot_dimension_numbers<[1], [0], [0], [1], [0, 0, 1, 1], [], []>} : vector<128x128xbf16>, vector<128x128xbf16>, vector<128x128xf32> -> vector<128x128xf32>
    %c0_16 = arith.constant 0 : index
    %c0_17 = arith.constant 0 : index
    %30 = vector.load %arg5[%c0_16, %c0_17] : memref<1x128xf32, #tpu.memory_space<vmem>>, vector<1x128xf32>
    %31 = vector.broadcast %30 : vector<1x128xf32> to vector<128x128xf32>
    %32 = arith.addf %29, %31 : vector<128x128xf32>
    %33 = arith.truncf %32 : vector<128x128xf32> to vector<128x128xbf16>
    %34 = math.tanh %33 : vector<128x128xbf16>
    %c0_18 = arith.constant 0 : index
    %c0_19 = arith.constant 0 : index
    %35 = vector.load %arg6[%c0_18, %c0_19] : memref<1x128xf32, #tpu.memory_space<vmem>>, vector<1x128xf32>
    %36 = arith.extf %34 : vector<128x128xbf16> to vector<128x128xf32>
    %37 = vector.broadcast %35 : vector<1x128xf32> to vector<128x128xf32>
    %38 = arith.mulf %36, %37 : vector<128x128xf32>
    %cst_20 = arith.constant dense<0.000000e+00> : vector<128xf32>
    %39 = vector.multi_reduction <add>, %38, %cst_20 [1] : vector<128x128xf32> to vector<128xf32>
    %c0_21 = arith.constant 0 : index
    %40 = memref.load %arg7[%c0_21] : memref<1xf32, #tpu.memory_space<smem>>
    %41 = vector.broadcast %40 : f32 to vector<128xf32>
    %42 = arith.addf %39, %41 : vector<128xf32>
    %43 = vector.shape_cast %42 : vector<128xf32> to vector<1x128xf32>
    %c0_22 = arith.constant 0 : index
    %c0_23 = arith.constant 0 : index
    %44 = vector.load %arg8[%c0_22, %c0_23] : memref<1x128xf32, #tpu.memory_space<vmem>>, vector<1x128xf32>
    tpu.vector_store %arg8[%c0_22, %c0_23], %43 {strides = array<i32>} : memref<1x128xf32, #tpu.memory_space<vmem>>, vector<1x128xf32>,
    return
  }
  func.func @transform_0(%arg0: i32) -> (i32, i32) {
    %c0_i32 = arith.constant 0 : i32
    %c0_i32_0 = arith.constant 0 : i32
    return %arg0, %c0_i32 : i32, i32
  }
  func.func @transform_1(%arg0: i32) -> (i32, i32) {
    %c0_i32 = arith.constant 0 : i32
    %c0_i32_0 = arith.constant 0 : i32
    %c0_i32_1 = arith.constant 0 : i32
    return %c0_i32, %c0_i32_0 : i32, i32
  }
  func.func @transform_2(%arg0: i32) -> (i32, i32) {
    %c0_i32 = arith.constant 0 : i32
    %c0_i32_0 = arith.constant 0 : i32
    %c0_i32_1 = arith.constant 0 : i32
    return %c0_i32, %c0_i32_0 : i32, i32
  }
  func.func @transform_3(%arg0: i32) -> (i32, i32) {
    %c0_i32 = arith.constant 0 : i32
    %c0_i32_0 = arith.constant 0 : i32
    %c0_i32_1 = arith.constant 0 : i32
    return %c0_i32, %c0_i32_0 : i32, i32
  }
  func.func @transform_4(%arg0: i32) -> (i32, i32) {
    %c0_i32 = arith.constant 0 : i32
    %c0_i32_0 = arith.constant 0 : i32
    %c0_i32_1 = arith.constant 0 : i32
    return %c0_i32, %c0_i32_0 : i32, i32
  }
  func.func @transform_5(%arg0: i32) -> (i32, i32) {
    %c0_i32 = arith.constant 0 : i32
    %c0_i32_0 = arith.constant 0 : i32
    %c0_i32_1 = arith.constant 0 : i32
    return %c0_i32, %c0_i32_0 : i32, i32
  }
  func.func @transform_6(%arg0: i32) -> i32 {
    %c0_i32 = arith.constant 0 : i32
    %c0_i32_0 = arith.constant 0 : i32
    return %c0_i32 : i32
  }
  func.func @transform_7(%arg0: i32) -> (i32, i32) {
    %c0_i32 = arith.constant 0 : i32
    %c0_i32_0 = arith.constant 0 : i32
    return %c0_i32, %arg0 : i32, i32
  }
}

</mosaic_0001>

<llo_original>
// kernel: tpu_custom_call.1
$region0: #{tpu_custom_call.1}
  #allocation0 [shape = 'u32[]', space=smem, size = 0x4, offset = 0x4, fixed_abs, tag = 'smem constant byte address 0x4 - core index']
  #allocation1 [shape = 'u32[72,128]{1,0:T(1,128)}', space=vmem, size = 0x9000, scoped, tag = 'internal scratch']
  #allocation2 [shape = 'f32[1]{0:T(128)S(6)}', space=smem, size = 0x200, scoped, tag = 'scoped memory for tpu_custom_call.1']
  %s0 = inlined_call_operand.vmem [shape: f32[128,4], index: 0, kind: input, shape index: {}]
  %s1 = inlined_call_operand.vmem [shape: f32[4,128], index: 1, kind: input, shape index: {}]
  %s2 = inlined_call_operand.vmem [shape: f32[1,128], index: 2, kind: input, shape index: {}]
  %s3 = inlined_call_operand.vmem [shape: bf16[128,128], index: 3, kind: input, shape index: {}]
  %s4 = inlined_call_operand.vmem [shape: f32[1,128], index: 4, kind: input, shape index: {}]
  %s5 = inlined_call_operand.vmem [shape: f32[1,128], index: 5, kind: input, shape index: {}]
  %s6 = inlined_call_operand.<no memory space> [shape: f32[1], index: 6, kind: input, shape index: {}]
  %s7 = inlined_call_operand.hbm [shape: f32[1,128], index: 7, kind: output, shape index: {}]
  %s8 = sld [smem:[#allocation0]]
  $region38: #{tpu_custom_call.1} parent=0
    _
  %s10 = ssub.s32 1, %s8
  %s11 = scalar_select 0, %s10, %s8
  %12 = sst [smem:[#allocation2]] %s6
  $region1: #{tpu_custom_call.1} parent=0
    #allocation3 [shape = 'u8[512]{0}', space=vmem, size = 0x400, scoped, tag = 'output window, operand 0, single buffered']
    #allocation4 [shape = 's32[1]{0}', space=sflag, size = 0x4, scoped, tag = 'scoped memory for tpu_custom_call.1']
    %13 = vsyncpa [#allocation4], 0
    // Predicated region
    $region2: #{tpu_custom_call.1} parent=1 // pred_check
      _
    $region3: #{tpu_custom_call.1} parent=1 // pred_check_branch
      %15 = sbr.rel (0) target = $region5
    $region4: #{tpu_custom_call.1} parent=1 // pred_region
      _
    $region5: #{tpu_custom_call.1} parent=1 // pred_fallthru
      _
    // Predicated region
    $region6: #{tpu_custom_call.1} parent=1 // pred_check
      _
    $region7: #{tpu_custom_call.1} parent=1 // pred_check_branch
      %17 = sbr.rel (0) target = $region9
    $region8: #{tpu_custom_call.1} parent=1 // pred_region
      _
    $region9: #{tpu_custom_call.1} parent=1 // pred_fallthru
      _
    // Predicated region
    $region10: #{tpu_custom_call.1} parent=1 // pred_check
      _
    $region11: #{tpu_custom_call.1} parent=1 // pred_check_branch
      %19 = sbr.rel (0) target = $region13
    $region12: #{tpu_custom_call.1} parent=1 // pred_region
      _
    $region13: #{tpu_custom_call.1} parent=1 // pred_fallthru
      _
    // Predicated region
    $region14: #{tpu_custom_call.1} parent=1 // pred_check
      _
    $region15: #{tpu_custom_call.1} parent=1 // pred_check_branch
      %21 = sbr.rel (0) target = $region17
    $region16: #{tpu_custom_call.1} parent=1 // pred_region
      _
    $region17: #{tpu_custom_call.1} parent=1 // pred_fallthru
      _
    // Predicated region
    $region18: #{tpu_custom_call.1} parent=1 // pred_check
      _
    $region19: #{tpu_custom_call.1} parent=1 // pred_check_branch
      %23 = sbr.rel (0) target = $region21
    $region20: #{tpu_custom_call.1} parent=1 // pred_region
      _
    $region21: #{tpu_custom_call.1} parent=1 // pred_fallthru
      _
    // Predicated region
    $region22: #{tpu_custom_call.1} parent=1 // pred_check
      _
    $region23: #{tpu_custom_call.1} parent=1 // pred_check_branch
      %25 = sbr.rel (0) target = $region25
    $region24: #{tpu_custom_call.1} parent=1 // pred_region
      _
    $region25: #{tpu_custom_call.1} parent=1 // pred_fallthru
      _
    // Predicated region
    $region26: #{tpu_custom_call.1} parent=1 // pred_check
      _
    $region27: #{tpu_custom_call.1} parent=1 // pred_check_branch
      %27 = sbr.rel (0) target = $region29
    $region28: #{tpu_custom_call.1} parent=1 // pred_region
      _
    $region29: #{tpu_custom_call.1} parent=1 // pred_fallthru
      _
    %v28 = vld [vmem:[%s0] sm:$0xff]
    %v29 = vld [vmem:[%s0 + $0x8] sm:$0xff]
    %v30 = vld [vmem:[%s0 + $0x10] sm:$0xff]
    %v31 = vld [vmem:[%s0 + $0x18] sm:$0xff]
    %v32 = vld [vmem:[%s0 + $0x20] sm:$0xff]
    %v33 = vld [vmem:[%s0 + $0x28] sm:$0xff]
    %v34 = vld [vmem:[%s0 + $0x30] sm:$0xff]
    %v35 = vld [vmem:[%s0 + $0x38] sm:$0xff]
    %v36 = vld [vmem:[%s0 + $0x40] sm:$0xff]
    %v37 = vld [vmem:[%s0 + $0x48] sm:$0xff]
    %v38 = vld [vmem:[%s0 + $0x50] sm:$0xff]
    %v39 = vld [vmem:[%s0 + $0x58] sm:$0xff]
    %v40 = vld [vmem:[%s0 + $0x60] sm:$0xff]
    %v41 = vld [vmem:[%s0 + $0x68] sm:$0xff]
    %v42 = vld [vmem:[%s0 + $0x70] sm:$0xff]
    %v43 = vld [vmem:[%s0 + $0x78] sm:$0xff]
    %v44 = vld [vmem:[%s1] sm:$0x1]
    %46 = vset.pattern.permute.xlu0 0
    %47 = vperm.xlu0 %46, %v28
    %v48 = vpop.permute.xlu0 %47
    %51 = vset.pattern.permute.xlu0 0
    %52 = vperm.xlu0 %51, %v29
    %v53 = vpop.permute.xlu0 %52
    %56 = vset.pattern.permute.xlu0 0
    %57 = vperm.xlu0 %56, %v30
    %v58 = vpop.permute.xlu0 %57
    %61 = vset.pattern.permute.xlu0 0
    %62 = vperm.xlu0 %61, %v31
    %v63 = vpop.permute.xlu0 %62
    %66 = vset.pattern.permute.xlu0 0
    %67 = vperm.xlu0 %66, %v32
    %v68 = vpop.permute.xlu0 %67
    %71 = vset.pattern.permute.xlu0 0
    %72 = vperm.xlu0 %71, %v33
    %v73 = vpop.permute.xlu0 %72
    %76 = vset.pattern.permute.xlu0 0
    %77 = vperm.xlu0 %76, %v34
    %v78 = vpop.permute.xlu0 %77
    %81 = vset.pattern.permute.xlu0 0
    %82 = vperm.xlu0 %81, %v35
    %v83 = vpop.permute.xlu0 %82
    %86 = vset.pattern.permute.xlu0 0
    %87 = vperm.xlu0 %86, %v36
    %v88 = vpop.permute.xlu0 %87
    %91 = vset.pattern.permute.xlu0 0
    %92 = vperm.xlu0 %91, %v37
    %v93 = vpop.permute.xlu0 %92
    %96 = vset.pattern.permute.xlu0 0
    %97 = vperm.xlu0 %96, %v38
    %v98 = vpop.permute.xlu0 %97
    %101 = vset.pattern.permute.xlu0 0
    %102 = vperm.xlu0 %101, %v39
    %v103 = vpop.permute.xlu0 %102
    %106 = vset.pattern.permute.xlu0 0
    %107 = vperm.xlu0 %106, %v40
    %v108 = vpop.permute.xlu0 %107
    %111 = vset.pattern.permute.xlu0 0
    %112 = vperm.xlu0 %111, %v41
    %v113 = vpop.permute.xlu0 %112
    %116 = vset.pattern.permute.xlu0 0
    %117 = vperm.xlu0 %116, %v42
    %v118 = vpop.permute.xlu0 %117
    %121 = vset.pattern.permute.xlu0 0
    %122 = vperm.xlu0 %121, %v43
    %v123 = vpop.permute.xlu0 %122
    %v125 = vperm.slane %v44, 0
    %v126 = vmul.f32 %v48, %v125
    %v127 = vmul.f32 %v53, %v125
    %v128 = vmul.f32 %v58, %v125
    %v129 = vmul.f32 %v63, %v125
    %v130 = vmul.f32 %v68, %v125
    %v131 = vmul.f32 %v73, %v125
    %v132 = vmul.f32 %v78, %v125
    %v133 = vmul.f32 %v83, %v125
    %v134 = vmul.f32 %v88, %v125
    %v135 = vmul.f32 %v93, %v125
    %v136 = vmul.f32 %v98, %v125
    %v137 = vmul.f32 %v103, %v125
    %v138 = vmul.f32 %v108, %v125
    %v139 = vmul.f32 %v113, %v125
    %v140 = vmul.f32 %v118, %v125
    %v141 = vmul.f32 %v123, %v125
    %v142 = vld [vmem:[%s1 + $0x1] sm:$0x1]
    %143 = vset.pattern.permute.xlu0 1
    %144 = vperm.xlu0 %143, %v28
    %v145 = vpop.permute.xlu0 %144
    %147 = vset.pattern.permute.xlu0 1
    %148 = vperm.xlu0 %147, %v29
    %v149 = vpop.permute.xlu0 %148
    %151 = vset.pattern.permute.xlu0 1
    %152 = vperm.xlu0 %151, %v30
    %v153 = vpop.permute.xlu0 %152
    %155 = vset.pattern.permute.xlu0 1
    %156 = vperm.xlu0 %155, %v31
    %v157 = vpop.permute.xlu0 %156
    %159 = vset.pattern.permute.xlu0 1
    %160 = vperm.xlu0 %159, %v32
    %v161 = vpop.permute.xlu0 %160
    %163 = vset.pattern.permute.xlu0 1
    %164 = vperm.xlu0 %163, %v33
    %v165 = vpop.permute.xlu0 %164
    %167 = vset.pattern.permute.xlu0 1
    %168 = vperm.xlu0 %167, %v34
    %v169 = vpop.permute.xlu0 %168
    %171 = vset.pattern.permute.xlu0 1
    %172 = vperm.xlu0 %171, %v35
    %v173 = vpop.permute.xlu0 %172
    %175 = vset.pattern.permute.xlu0 1
    %176 = vperm.xlu0 %175, %v36
    %v177 = vpop.permute.xlu0 %176
    %179 = vset.pattern.permute.xlu0 1
    %180 = vperm.xlu0 %179, %v37
    %v181 = vpop.permute.xlu0 %180
    %183 = vset.pattern.permute.xlu0 1
    %184 = vperm.xlu0 %183, %v38
    %v185 = vpop.permute.xlu0 %184
    %187 = vset.pattern.permute.xlu0 1
    %188 = vperm.xlu0 %187, %v39
    %v189 = vpop.permute.xlu0 %188
    %191 = vset.pattern.permute.xlu0 1
    %192 = vperm.xlu0 %191, %v40
    %v193 = vpop.permute.xlu0 %192
    %195 = vset.pattern.permute.xlu0 1
    %196 = vperm.xlu0 %195, %v41
    %v197 = vpop.permute.xlu0 %196
    %199 = vset.pattern.permute.xlu0 1
    %200 = vperm.xlu0 %199, %v42
    %v201 = vpop.permute.xlu0 %200
    %203 = vset.pattern.permute.xlu0 1
    %204 = vperm.xlu0 %203, %v43
    %v205 = vpop.permute.xlu0 %204
    %v207 = vperm.slane %v142, 0
    %v208 = vmul.f32 %v145, %v207
    %v209 = vmul.f32 %v149, %v207
    %v210 = vmul.f32 %v153, %v207
    %v211 = vmul.f32 %v157, %v207
    %v212 = vmul.f32 %v161, %v207
    %v213 = vmul.f32 %v165, %v207
    %v214 = vmul.f32 %v169, %v207
    %v215 = vmul.f32 %v173, %v207
    %v216 = vmul.f32 %v177, %v207
    %v217 = vmul.f32 %v181, %v207
    %v218 = vmul.f32 %v185, %v207
    %v219 = vmul.f32 %v189, %v207
    %v220 = vmul.f32 %v193, %v207
    %v221 = vmul.f32 %v197, %v207
    %v222 = vmul.f32 %v201, %v207
    %v223 = vmul.f32 %v205, %v207
    %v224 = vadd.f32 %v126, %v208
    %v225 = vadd.f32 %v127, %v209
    %v226 = vadd.f32 %v128, %v210
    %v227 = vadd.f32 %v129, %v211
    %v228 = vadd.f32 %v130, %v212
    %v229 = vadd.f32 %v131, %v213
    %v230 = vadd.f32 %v132, %v214
    %v231 = vadd.f32 %v133, %v215
    %v232 = vadd.f32 %v134, %v216
    %v233 = vadd.f32 %v135, %v217
    %v234 = vadd.f32 %v136, %v218
    %v235 = vadd.f32 %v137, %v219
    %v236 = vadd.f32 %v138, %v220
    %v237 = vadd.f32 %v139, %v221
    %v238 = vadd.f32 %v140, %v222
    %v239 = vadd.f32 %v141, %v223
    %v240 = vld [vmem:[%s1 + $0x2] sm:$0x1]
    %241 = vset.pattern.permute.xlu0 2
    %242 = vperm.xlu0 %241, %v28
    %v243 = vpop.permute.xlu0 %242
    %245 = vset.pattern.permute.xlu0 2
    %246 = vperm.xlu0 %245, %v29
    %v247 = vpop.permute.xlu0 %246
    %249 = vset.pattern.permute.xlu0 2
    %250 = vperm.xlu0 %249, %v30
    %v251 = vpop.permute.xlu0 %250
    %253 = vset.pattern.permute.xlu0 2
    %254 = vperm.xlu0 %253, %v31
    %v255 = vpop.permute.xlu0 %254
    %257 = vset.pattern.permute.xlu0 2
    %258 = vperm.xlu0 %257, %v32
    %v259 = vpop.permute.xlu0 %258
    %261 = vset.pattern.permute.xlu0 2
    %262 = vperm.xlu0 %261, %v33
    %v263 = vpop.permute.xlu0 %262
    %265 = vset.pattern.permute.xlu0 2
    %266 = vperm.xlu0 %265, %v34
    %v267 = vpop.permute.xlu0 %266
    %269 = vset.pattern.permute.xlu0 2
    %270 = vperm.xlu0 %269, %v35
    %v271 = vpop.permute.xlu0 %270
    %273 = vset.pattern.permute.xlu0 2
    %274 = vperm.xlu0 %273, %v36
    %v275 = vpop.permute.xlu0 %274
    %277 = vset.pattern.permute.xlu0 2
    %278 = vperm.xlu0 %277, %v37
    %v279 = vpop.permute.xlu0 %278
    %281 = vset.pattern.permute.xlu0 2
    %282 = vperm.xlu0 %281, %v38
    %v283 = vpop.permute.xlu0 %282
    %285 = vset.pattern.permute.xlu0 2
    %286 = vperm.xlu0 %285, %v39
    %v287 = vpop.permute.xlu0 %286
    %289 = vset.pattern.permute.xlu0 2
    %290 = vperm.xlu0 %289, %v40
    %v291 = vpop.permute.xlu0 %290
    %293 = vset.pattern.permute.xlu0 2
    %294 = vperm.xlu0 %293, %v41
    %v295 = vpop.permute.xlu0 %294
    %297 = vset.pattern.permute.xlu0 2
    %298 = vperm.xlu0 %297, %v42
    %v299 = vpop.permute.xlu0 %298
    %301 = vset.pattern.permute.xlu0 2
    %302 = vperm.xlu0 %301, %v43
    %v303 = vpop.permute.xlu0 %302
    %v305 = vperm.slane %v240, 0
    %v306 = vmul.f32 %v243, %v305
    %v307 = vmul.f32 %v247, %v305
    %v308 = vmul.f32 %v251, %v305
    %v309 = vmul.f32 %v255, %v305
    %v310 = vmul.f32 %v259, %v305
    %v311 = vmul.f32 %v263, %v305
    %v312 = vmul.f32 %v267, %v305
    %v313 = vmul.f32 %v271, %v305
    %v314 = vmul.f32 %v275, %v305
    %v315 = vmul.f32 %v279, %v305
    %v316 = vmul.f32 %v283, %v305
    %v317 = vmul.f32 %v287, %v305
    %v318 = vmul.f32 %v291, %v305
    %v319 = vmul.f32 %v295, %v305
    %v320 = vmul.f32 %v299, %v305
    %v321 = vmul.f32 %v303, %v305
    %v322 = vadd.f32 %v224, %v306
    %v323 = vadd.f32 %v225, %v307
    %v324 = vadd.f32 %v226, %v308
    %v325 = vadd.f32 %v227, %v309
    %v326 = vadd.f32 %v228, %v310
    %v327 = vadd.f32 %v229, %v311
    %v328 = vadd.f32 %v230, %v312
    %v329 = vadd.f32 %v231, %v313
    %v330 = vadd.f32 %v232, %v314
    %v331 = vadd.f32 %v233, %v315
    %v332 = vadd.f32 %v234, %v316
    %v333 = vadd.f32 %v235, %v317
    %v334 = vadd.f32 %v236, %v318
    %v335 = vadd.f32 %v237, %v319
    %v336 = vadd.f32 %v238, %v320
    %v337 = vadd.f32 %v239, %v321
    %v338 = vld [vmem:[%s1 + $0x3] sm:$0x1]
    %339 = vset.pattern.permute.xlu0 3
    %340 = vperm.xlu0 %339, %v28
    %v341 = vpop.permute.xlu0 %340
    %343 = vset.pattern.permute.xlu0 3
    %344 = vperm.xlu0 %343, %v29
    %v345 = vpop.permute.xlu0 %344
    %347 = vset.pattern.permute.xlu0 3
    %348 = vperm.xlu0 %347, %v30
    %v349 = vpop.permute.xlu0 %348
    %351 = vset.pattern.permute.xlu0 3
    %352 = vperm.xlu0 %351, %v31
    %v353 = vpop.permute.xlu0 %352
    %355 = vset.pattern.permute.xlu0 3
    %356 = vperm.xlu0 %355, %v32
    %v357 = vpop.permute.xlu0 %356
    %359 = vset.pattern.permute.xlu0 3
    %360 = vperm.xlu0 %359, %v33
    %v361 = vpop.permute.xlu0 %360
    %363 = vset.pattern.permute.xlu0 3
    %364 = vperm.xlu0 %363, %v34
    %v365 = vpop.permute.xlu0 %364
    %367 = vset.pattern.permute.xlu0 3
    %368 = vperm.xlu0 %367, %v35
    %v369 = vpop.permute.xlu0 %368
    %371 = vset.pattern.permute.xlu0 3
    %372 = vperm.xlu0 %371, %v36
    %v373 = vpop.permute.xlu0 %372
    %375 = vset.pattern.permute.xlu0 3
    %376 = vperm.xlu0 %375, %v37
    %v377 = vpop.permute.xlu0 %376
    %379 = vset.pattern.permute.xlu0 3
    %380 = vperm.xlu0 %379, %v38
    %v381 = vpop.permute.xlu0 %380
    %383 = vset.pattern.permute.xlu0 3
    %384 = vperm.xlu0 %383, %v39
    %v385 = vpop.permute.xlu0 %384
    %387 = vset.pattern.permute.xlu0 3
    %388 = vperm.xlu0 %387, %v40
    %v389 = vpop.permute.xlu0 %388
    %391 = vset.pattern.permute.xlu0 3
    %392 = vperm.xlu0 %391, %v41
    %v393 = vpop.permute.xlu0 %392
    %395 = vset.pattern.permute.xlu0 3
    %396 = vperm.xlu0 %395, %v42
    %v397 = vpop.permute.xlu0 %396
    %399 = vset.pattern.permute.xlu0 3
    %400 = vperm.xlu0 %399, %v43
    %v401 = vpop.permute.xlu0 %400
    %v403 = vperm.slane %v338, 0
    %v404 = vmul.f32 %v341, %v403
    %v405 = vmul.f32 %v345, %v403
    %v406 = vmul.f32 %v349, %v403
    %v407 = vmul.f32 %v353, %v403
    %v408 = vmul.f32 %v357, %v403
    %v409 = vmul.f32 %v361, %v403
    %v410 = vmul.f32 %v365, %v403
    %v411 = vmul.f32 %v369, %v403
    %v412 = vmul.f32 %v373, %v403
    %v413 = vmul.f32 %v377, %v403
    %v414 = vmul.f32 %v381, %v403
    %v415 = vmul.f32 %v385, %v403
    %v416 = vmul.f32 %v389, %v403
    %v417 = vmul.f32 %v393, %v403
    %v418 = vmul.f32 %v397, %v403
    %v419 = vmul.f32 %v401, %v403
    %v420 = vadd.f32 %v322, %v404
    %v421 = vadd.f32 %v323, %v405
    %v422 = vadd.f32 %v324, %v406
    %v423 = vadd.f32 %v325, %v407
    %v424 = vadd.f32 %v326, %v408
    %v425 = vadd.f32 %v327, %v409
    %v426 = vadd.f32 %v328, %v410
    %v427 = vadd.f32 %v329, %v411
    %v428 = vadd.f32 %v330, %v412
    %v429 = vadd.f32 %v331, %v413
    %v430 = vadd.f32 %v332, %v414
    %v431 = vadd.f32 %v333, %v415
    %v432 = vadd.f32 %v334, %v416
    %v433 = vadd.f32 %v335, %v417
    %v434 = vadd.f32 %v336, %v418
    %v435 = vadd.f32 %v337, %v419
    %v436 = vld [vmem:[%s2] sm:$0x1]
    %v438 = vperm.slane %v436, 0
    %v440 = vadd.f32 %v420, %v438
    %v441 = vadd.f32 %v421, %v438
    %v442 = vadd.f32 %v422, %v438
    %v443 = vadd.f32 %v423, %v438
    %v444 = vadd.f32 %v424, %v438
    %v445 = vadd.f32 %v425, %v438
    %v446 = vadd.f32 %v426, %v438
    %v447 = vadd.f32 %v427, %v438
    %v448 = vadd.f32 %v428, %v438
    %v449 = vadd.f32 %v429, %v438
    %v450 = vadd.f32 %v430, %v438
    %v451 = vadd.f32 %v431, %v438
    %v452 = vadd.f32 %v432, %v438
    %v453 = vadd.f32 %v433, %v438
    %v454 = vadd.f32 %v434, %v438
    %v455 = vadd.f32 %v435, %v438
    %v456 = vpack.c.bf16 %v441, %v440
    %v457 = vpack.c.bf16 %v443, %v442
    %v458 = vpack.c.bf16 %v445, %v444
    %v459 = vpack.c.bf16 %v447, %v446
    %v460 = vpack.c.bf16 %v449, %v448
    %v461 = vpack.c.bf16 %v451, %v450
    %v462 = vpack.c.bf16 %v453, %v452
    %v463 = vpack.c.bf16 %v455, %v454
    %v464 = vunpack.c.l.bf16 %v456
    %v465 = vunpack.c.h.bf16 %v456
    %v466 = vunpack.c.l.bf16 %v457
    %v467 = vunpack.c.h.bf16 %v457
    %v468 = vunpack.c.l.bf16 %v458
    %v469 = vunpack.c.h.bf16 %v458
    %v470 = vunpack.c.l.bf16 %v459
    %v471 = vunpack.c.h.bf16 %v459
    %v472 = vunpack.c.l.bf16 %v460
    %v473 = vunpack.c.h.bf16 %v460
    %v474 = vunpack.c.l.bf16 %v461
    %v475 = vunpack.c.h.bf16 %v461
    %v476 = vunpack.c.l.bf16 %v462
    %v477 = vunpack.c.h.bf16 %v462
    %v478 = vunpack.c.l.bf16 %v463
    %v479 = vunpack.c.h.bf16 %v463
    %v480 = vtanh.pop %v464
    %v481 = vtanh.pop %v465
    %v482 = vtanh.pop %v466
    %v483 = vtanh.pop %v467
    %v484 = vtanh.pop %v468
    %v485 = vtanh.pop %v469
    %v486 = vtanh.pop %v470
    %v487 = vtanh.pop %v471
    %v488 = vtanh.pop %v472
    %v489 = vtanh.pop %v473
    %v490 = vtanh.pop %v474
    %v491 = vtanh.pop %v475
    %v492 = vtanh.pop %v476
    %v493 = vtanh.pop %v477
    %v494 = vtanh.pop %v478
    %v495 = vtanh.pop %v479
    %v496 = vpack.c.bf16 %v481, %v480
    %v497 = vpack.c.bf16 %v483, %v482
    %v498 = vpack.c.bf16 %v485, %v484
    %v499 = vpack.c.bf16 %v487, %v486
    %v500 = vpack.c.bf16 %v489, %v488
    %v501 = vpack.c.bf16 %v491, %v490
    %v502 = vpack.c.bf16 %v493, %v492
    %v503 = vpack.c.bf16 %v495, %v494
    %v504 = vld [vmem:[%s3] sm:$0xf]
    %v505 = vld [vmem:[%s3 + $0x4] sm:$0xf]
    %v506 = vld [vmem:[%s3 + $0x8] sm:$0xf]
    %v507 = vld [vmem:[%s3 + $0xc] sm:$0xf]
    %v508 = vld [vmem:[%s3 + $0x10] sm:$0xf]
    %v509 = vld [vmem:[%s3 + $0x14] sm:$0xf]
    %v510 = vld [vmem:[%s3 + $0x18] sm:$0xf]
    %v511 = vld [vmem:[%s3 + $0x1c] sm:$0xf]
    %v512 = vld [vmem:[%s3 + $0x20] sm:$0xf]
    %v513 = vld [vmem:[%s3 + $0x24] sm:$0xf]
    %v514 = vld [vmem:[%s3 + $0x28] sm:$0xf]
    %v515 = vld [vmem:[%s3 + $0x2c] sm:$0xf]
    %v516 = vld [vmem:[%s3 + $0x30] sm:$0xf]
    %v517 = vld [vmem:[%s3 + $0x34] sm:$0xf]
    %v518 = vld [vmem:[%s3 + $0x38] sm:$0xf]
    %v519 = vld [vmem:[%s3 + $0x3c] sm:$0xf]
    %v520 = vld [vmem:[%s4] sm:$0x1]
    %v522 = vperm.slane %v520, 0
    %v540 = vunpack.c.l.b16 %v504
    %v541 = vunpack.c.l.b16 %v505
    %v542 = vunpack.c.l.b16 %v506
    %v543 = vunpack.c.l.b16 %v507
    %v544 = vunpack.c.l.b16 %v508
    %v545 = vunpack.c.l.b16 %v509
    %v546 = vunpack.c.l.b16 %v510
    %v547 = vunpack.c.l.b16 %v511
    %v548 = vunpack.c.l.b16 %v512
    %v549 = vunpack.c.l.b16 %v513
    %v550 = vunpack.c.l.b16 %v514
    %v551 = vunpack.c.l.b16 %v515
    %v552 = vunpack.c.l.b16 %v516
    %v553 = vunpack.c.l.b16 %v517
    %v554 = vunpack.c.l.b16 %v518
    %v555 = vunpack.c.l.b16 %v519
    %v556 = vpack.c.b16 %v541, %v540
    %v557 = vpack.c.b16 %v543, %v542
    %v558 = vpack.c.b16 %v545, %v544
    %v559 = vpack.c.b16 %v547, %v546
    %v560 = vpack.c.b16 %v549, %v548
    %v561 = vpack.c.b16 %v551, %v550
    %v562 = vpack.c.b16 %v553, %v552
    %v563 = vpack.c.b16 %v555, %v554
    %572 = vmatpush.bf16.msra.mxu0 %v563
    %573 = vmatpush.bf16.msra.mxu0 %v562
    %574 = vmatpush.bf16.msra.mxu0 %v561
    %575 = vmatpush.bf16.msra.mxu0 %v560
    %576 = vmatpush.bf16.msra.mxu0 %v559
    %577 = vmatpush.bf16.msra.mxu0 %v558
    %578 = vmatpush.bf16.msra.mxu0 %v557
    %579 = vmatpush.bf16.msra.mxu0 %v556
    %580 = vmatmul.bf16.gmra.mxu0 %v496
    %v581 = vpop.f32.mrf.mxu0
    %v582 = vadd.f32 %v522, %v581
    %v583 = vpop.f32.mrf.mxu0
    %v584 = vadd.f32 %v522, %v583
    %585 = vmatmul.bf16.gmra.mxu0 %v497
    %v586 = vpop.f32.mrf.mxu0
    %v587 = vadd.f32 %v522, %v586
    %v588 = vpop.f32.mrf.mxu0
    %v589 = vadd.f32 %v522, %v588
    %590 = vmatmul.bf16.gmra.mxu0 %v498
    %v591 = vpop.f32.mrf.mxu0
    %v592 = vadd.f32 %v522, %v591
    %v593 = vpop.f32.mrf.mxu0
    %v594 = vadd.f32 %v522, %v593
    %595 = vmatmul.bf16.gmra.mxu0 %v499
    %v596 = vpop.f32.mrf.mxu0
    %v597 = vadd.f32 %v522, %v596
    %v598 = vpop.f32.mrf.mxu0
    %v599 = vadd.f32 %v522, %v598
    %600 = vmatmul.bf16.gmra.mxu0 %v500
    %v601 = vpop.f32.mrf.mxu0
    %v602 = vadd.f32 %v522, %v601
    %v603 = vpop.f32.mrf.mxu0
    %v604 = vadd.f32 %v522, %v603
    %605 = vmatmul.bf16.gmra.mxu0 %v501
    %v606 = vpop.f32.mrf.mxu0
    %v607 = vadd.f32 %v522, %v606
    %v608 = vpop.f32.mrf.mxu0
    %v609 = vadd.f32 %v522, %v608
    %610 = vmatmul.bf16.gmra.mxu0 %v502
    %v611 = vpop.f32.mrf.mxu0
    %v612 = vadd.f32 %v522, %v611
    %v613 = vpop.f32.mrf.mxu0
    %v614 = vadd.f32 %v522, %v613
    %615 = vmatmul.bf16.gmra.mxu0 %v503
    %v616 = vpop.f32.mrf.mxu0
    %v617 = vadd.f32 %v522, %v616
    %v618 = vpop.f32.mrf.mxu0
    %v619 = vadd.f32 %v522, %v618
    %620 = vdwg.mxu0
    %v621 = vpack.c.bf16 %v582, %v582
    %v622 = vpack.c.bf16 %v584, %v584
    %v623 = vpack.c.bf16 %v587, %v587
    %v624 = vpack.c.bf16 %v589, %v589
    %v625 = vpack.c.bf16 %v592, %v592
    %v626 = vpack.c.bf16 %v594, %v594
    %v627 = vpack.c.bf16 %v597, %v597
    %v628 = vpack.c.bf16 %v599, %v599
    %v629 = vpack.c.bf16 %v602, %v602
    %v630 = vpack.c.bf16 %v604, %v604
    %v631 = vpack.c.bf16 %v607, %v607
    %v632 = vpack.c.bf16 %v609, %v609
    %v633 = vpack.c.bf16 %v612, %v612
    %v634 = vpack.c.bf16 %v614, %v614
    %v635 = vpack.c.bf16 %v617, %v617
    %v636 = vpack.c.bf16 %v619, %v619
    %v637 = vunpack.c.l.bf16 %v621
    %v638 = vunpack.c.l.bf16 %v622
    %v639 = vunpack.c.l.bf16 %v623
    %v640 = vunpack.c.l.bf16 %v624
    %v641 = vunpack.c.l.bf16 %v625
    %v642 = vunpack.c.l.bf16 %v626
    %v643 = vunpack.c.l.bf16 %v627
    %v644 = vunpack.c.l.bf16 %v628
    %v645 = vunpack.c.l.bf16 %v629
    %v646 = vunpack.c.l.bf16 %v630
    %v647 = vunpack.c.l.bf16 %v631
    %v648 = vunpack.c.l.bf16 %v632
    %v649 = vunpack.c.l.bf16 %v633
    %v650 = vunpack.c.l.bf16 %v634
    %v651 = vunpack.c.l.bf16 %v635
    %v652 = vunpack.c.l.bf16 %v636
    %v653 = vtanh.pop %v637
    %v654 = vtanh.pop %v638
    %v655 = vtanh.pop %v639
    %v656 = vtanh.pop %v640
    %v657 = vtanh.pop %v641
    %v658 = vtanh.pop %v642
    %v659 = vtanh.pop %v643
    %v660 = vtanh.pop %v644
    %v661 = vtanh.pop %v645
    %v662 = vtanh.pop %v646
    %v663 = vtanh.pop %v647
    %v664 = vtanh.pop %v648
    %v665 = vtanh.pop %v649
    %v666 = vtanh.pop %v650
    %v667 = vtanh.pop %v651
    %v668 = vtanh.pop %v652
    %v669 = vpack.c.bf16 %v653, %v653
    %v670 = vpack.c.bf16 %v654, %v654
    %v671 = vpack.c.bf16 %v655, %v655
    %v672 = vpack.c.bf16 %v656, %v656
    %v673 = vpack.c.bf16 %v657, %v657
    %v674 = vpack.c.bf16 %v658, %v658
    %v675 = vpack.c.bf16 %v659, %v659
    %v676 = vpack.c.bf16 %v660, %v660
    %v677 = vpack.c.bf16 %v661, %v661
    %v678 = vpack.c.bf16 %v662, %v662
    %v679 = vpack.c.bf16 %v663, %v663
    %v680 = vpack.c.bf16 %v664, %v664
    %v681 = vpack.c.bf16 %v665, %v665
    %v682 = vpack.c.bf16 %v666, %v666
    %v683 = vpack.c.bf16 %v667, %v667
    %v684 = vpack.c.bf16 %v668, %v668
    %v685 = vld [vmem:[%s5] sm:$0x1]
    %v686 = vunpack.c.l.bf16 %v669
    %v687 = vunpack.c.l.bf16 %v670
    %v688 = vunpack.c.l.bf16 %v671
    %v689 = vunpack.c.l.bf16 %v672
    %v690 = vunpack.c.l.bf16 %v673
    %v691 = vunpack.c.l.bf16 %v674
    %v692 = vunpack.c.l.bf16 %v675
    %v693 = vunpack.c.l.bf16 %v676
    %v694 = vunpack.c.l.bf16 %v677
    %v695 = vunpack.c.l.bf16 %v678
    %v696 = vunpack.c.l.bf16 %v679
    %v697 = vunpack.c.l.bf16 %v680
    %v698 = vunpack.c.l.bf16 %v681
    %v699 = vunpack.c.l.bf16 %v682
    %v700 = vunpack.c.l.bf16 %v683
    %v701 = vunpack.c.l.bf16 %v684
    %v703 = vperm.slane %v685, 0
    %v705 = vmul.f32 %v686, %v703
    %v706 = vmul.f32 %v687, %v703
    %v707 = vmul.f32 %v688, %v703
    %v708 = vmul.f32 %v689, %v703
    %v709 = vmul.f32 %v690, %v703
    %v710 = vmul.f32 %v691, %v703
    %v711 = vmul.f32 %v692, %v703
    %v712 = vmul.f32 %v693, %v703
    %v713 = vmul.f32 %v694, %v703
    %v714 = vmul.f32 %v695, %v703
    %v715 = vmul.f32 %v696, %v703
    %v716 = vmul.f32 %v697, %v703
    %v717 = vmul.f32 %v698, %v703
    %v718 = vmul.f32 %v699, %v703
    %v719 = vmul.f32 %v700, %v703
    %v720 = vmul.f32 %v701, %v703
    %721 = vadd.xlane.f32.xlu0 %v705
    %v722 = vpop.xlane.xlu0 %721
    %723 = vadd.xlane.f32.xlu0 %v706
    %v724 = vpop.xlane.xlu0 %723
    %725 = vadd.xlane.f32.xlu0 %v707
    %v726 = vpop.xlane.xlu0 %725
    %727 = vadd.xlane.f32.xlu0 %v708
    %v728 = vpop.xlane.xlu0 %727
    %729 = vadd.xlane.f32.xlu0 %v709
    %v730 = vpop.xlane.xlu0 %729
    %731 = vadd.xlane.f32.xlu0 %v710
    %v732 = vpop.xlane.xlu0 %731
    %733 = vadd.xlane.f32.xlu0 %v711
    %v734 = vpop.xlane.xlu0 %733
    %735 = vadd.xlane.f32.xlu0 %v712
    %v736 = vpop.xlane.xlu0 %735
    %737 = vadd.xlane.f32.xlu0 %v713
    %v738 = vpop.xlane.xlu0 %737
    %739 = vadd.xlane.f32.xlu0 %v714
    %v740 = vpop.xlane.xlu0 %739
    %741 = vadd.xlane.f32.xlu0 %v715
    %v742 = vpop.xlane.xlu0 %741
    %743 = vadd.xlane.f32.xlu0 %v716
    %v744 = vpop.xlane.xlu0 %743
    %745 = vadd.xlane.f32.xlu0 %v717
    %v746 = vpop.xlane.xlu0 %745
    %747 = vadd.xlane.f32.xlu0 %v718
    %v748 = vpop.xlane.xlu0 %747
    %749 = vadd.xlane.f32.xlu0 %v719
    %v750 = vpop.xlane.xlu0 %749
    %751 = vadd.xlane.f32.xlu0 %v720
    %v752 = vpop.xlane.xlu0 %751
    %s753 = sld [smem:[#allocation2]]
    %v754 = vstv %s753
    %v755 = vadd.f32 %v722, %v754
    %v756 = vadd.f32 %v724, %v754
    %v757 = vadd.f32 %v726, %v754
    %v758 = vadd.f32 %v728, %v754
    %v759 = vadd.f32 %v730, %v754
    %v760 = vadd.f32 %v732, %v754
    %v761 = vadd.f32 %v734, %v754
    %v762 = vadd.f32 %v736, %v754
    %v763 = vadd.f32 %v738, %v754
    %v764 = vadd.f32 %v740, %v754
    %v765 = vadd.f32 %v742, %v754
    %v766 = vadd.f32 %v744, %v754
    %v767 = vadd.f32 %v746, %v754
    %v768 = vadd.f32 %v748, %v754
    %v769 = vadd.f32 %v750, %v754
    %v770 = vadd.f32 %v752, %v754
    %v787 = vlaneseq
    %v788 = vand.u32 %v787, 127
    %v789 = vperm.slane %v755, %v788
    %v790 = vadd.s32 %v788, 4294967288
    %v791 = vperm.slane %v756, %v790
    %vm792 = vcmask 130112
    %v793 = vsel %vm792, %v791, %v789
    %v794 = vadd.s32 %v788, 4294967280
    %v795 = vperm.slane %v757, %v794
    %vm796 = vcmask 195712
    %v797 = vsel %vm796, %v795, %v793
    %v798 = vadd.s32 %v788, 4294967272
    %v799 = vperm.slane %v758, %v798
    %vm800 = vcmask 261312
    %v801 = vsel %vm800, %v799, %v797
    %v802 = vadd.s32 %v788, 4294967264
    %v803 = vperm.slane %v759, %v802
    %vm804 = vcmask 326912
    %v805 = vsel %vm804, %v803, %v801
    %v806 = vadd.s32 %v788, 4294967256
    %v807 = vperm.slane %v760, %v806
    %vm808 = vcmask 392512
    %v809 = vsel %vm808, %v807, %v805
    %v810 = vadd.s32 %v788, 4294967248
    %v811 = vperm.slane %v761, %v810
    %vm812 = vcmask 458112
    %v813 = vsel %vm812, %v811, %v809
    %v814 = vadd.s32 %v788, 4294967240
    %v815 = vperm.slane %v762, %v814
    %vm816 = vcmask 523712
    %v817 = vsel %vm816, %v815, %v813
    %v818 = vadd.s32 %v788, 4294967232
    %v819 = vperm.slane %v763, %v818
    %vm820 = vcmask 589312
    %v821 = vsel %vm820, %v819, %v817
    %v822 = vadd.s32 %v788, 4294967224
    %v823 = vperm.slane %v764, %v822
    %vm824 = vcmask 654912
    %v825 = vsel %vm824, %v823, %v821
    %v826 = vadd.s32 %v788, 4294967216
    %v827 = vperm.slane %v765, %v826
    %vm828 = vcmask 720512
    %v829 = vsel %vm828, %v827, %v825
    %v830 = vadd.s32 %v788, 4294967208
    %v831 = vperm.slane %v766, %v830
    %vm832 = vcmask 786112
    %v833 = vsel %vm832, %v831, %v829
    %v834 = vadd.s32 %v788, 4294967200
    %v835 = vperm.slane %v767, %v834
    %vm836 = vcmask 851712
    %v837 = vsel %vm836, %v835, %v833
    %v838 = vadd.s32 %v788, 4294967192
    %v839 = vperm.slane %v768, %v838
    %vm840 = vcmask 917312
    %v841 = vsel %vm840, %v839, %v837
    %v842 = vadd.s32 %v788, 4294967184
    %v843 = vperm.slane %v769, %v842
    %vm844 = vcmask 982912
    %v845 = vsel %vm844, %v843, %v841
    %v846 = vadd.s32 %v788, 4294967176
    %v847 = vperm.slane %v770, %v846
    %vm848 = vcmask 1048512
    %v849 = vsel %vm848, %v847, %v845
    %851 = vst [vmem:[#allocation3] sm:$0x1] %v849
    // Predicated region
    $region30: #{tpu_custom_call.1} parent=1 // pred_check
      _
    $region31: #{tpu_custom_call.1} parent=1 // pred_check_branch
      %853 = sbr.rel (0) target = $region33
    $region32: #{tpu_custom_call.1} parent=1 // pred_region
      %855 = vsyncadd [#allocation4], 0
      %s857 = sshll.u32 [#allocation3], 4
      %s858 = int_to_ptr.vmem [resolvable:$true] %s857
      %s859 = sshll.u32 %s7, 4
      %s860 = int_to_ptr.hbm [resolvable:$true] %s859
      %862 = dma.vmem_to_hbm [thread:$0]  %s858, 16, %s860, [#allocation4]
    $region33: #{tpu_custom_call.1} parent=1 // pred_fallthru
      _
    // Predicated region
    $region34: #{tpu_custom_call.1} parent=1 // pred_check
      _
    $region35: #{tpu_custom_call.1} parent=1 // pred_check_branch
      %864 = sbr.rel (0) target = $region37
    $region36: #{tpu_custom_call.1} parent=1 // pred_region
      %866 = dma.done [#allocation4], 16
    $region37: #{tpu_custom_call.1} parent=1 // pred_fallthru
      _
    %867 = vsyncpa [#allocation4], 1

</llo_original>
